<compile_context>
chip_gen: v7x
topology: tpu7x:2x2x1
jax: 0.10.0
libtpu: 0.0.40
codegen_flags: <defaults>
</compile_context>

<pallas_src>
import math

import jax
import jax.numpy as jnp
from jax import lax
from jax.experimental import pallas as pl
from jax.experimental.pallas import tpu as pltpu

EPS = 1e-5


# ---------------------------------------------------------------------------
# Generation-aware VMEM budget
# ---------------------------------------------------------------------------
def _vmem_capacity_bytes():
    try:
        return int(pltpu.get_tpu_info().vmem_capacity_bytes)
    except Exception:
        return 64 * 1024 * 1024  # conservative default (v7x per-TC VMEM)


def _vmem_limit_bytes():
    cap = _vmem_capacity_bytes()
    # ~70% of physical VMEM, always leaving >=16 MiB of compiler headroom.
    return max(32 * 1024 * 1024, min(int(cap * 0.7), cap - 16 * 1024 * 1024))


# ---------------------------------------------------------------------------
# Pass 1: per-feature sum / sum-of-squares streamed over N (x read once).
# Grid = (n_split [parallel, feeds both v7x TCs], row_tiles [arbitrary]).
# Partial sums accumulate directly into the resident (8, D) output blocks.
# ---------------------------------------------------------------------------
def _make_stats_kernel(n_total, tile_n, tiles_per_split, exact):
    groups = tile_n // 8 if (tile_n % 8 == 0) else 0

    def accumulate(x, sum_ref, ssq_ref):
        if groups:
            # (tile_n, D) -> (groups, 8, D): keeps the streamed loop as pure
            # vadds; the cross-sublane reduce happens later in the fold kernel.
            xr = x.reshape(groups, 8, x.shape[-1])
            sum_ref[...] += jnp.sum(xr, axis=0)
            ssq_ref[...] += jnp.sum(xr * xr, axis=0)
        else:
            # tile_n not a multiple of 8 (single full-N tile); use row 0 only.
            sum_ref[0:1, :] += jnp.sum(x, axis=0, keepdims=True)
            ssq_ref[0:1, :] += jnp.sum(x * x, axis=0, keepdims=True)

    def kernel(x_ref, sum_ref, ssq_ref):
        i = pl.program_id(1)

        @pl.when(i == 0)
        def _init():
            sum_ref[...] = jnp.zeros_like(sum_ref)
            ssq_ref[...] = jnp.zeros_like(ssq_ref)

        x = x_ref[...].astype(jnp.float32)

        if exact:
            accumulate(x, sum_ref, ssq_ref)
        else:
            start = (pl.program_id(0) * tiles_per_split + i) * tile_n
            is_full = start + tile_n <= n_total

            @pl.when(is_full)
            def _full():
                accumulate(x, sum_ref, ssq_ref)

            @pl.when(jnp.logical_not(is_full))
            def _ragged():
                row = lax.broadcasted_iota(jnp.int32, x.shape, 0)
                accumulate(jnp.where(row < (n_total - start), x, 0.0),
                           sum_ref, ssq_ref)

    return kernel


# ---------------------------------------------------------------------------
# Fold: combine (n_split*8, D) partial sums -> scale = gamma * rsqrt(var+eps),
# shift = beta - mean*scale. Tiny (O(D)) kernel, single grid step.
# ---------------------------------------------------------------------------
def _make_fold_kernel(n_total):
    inv_n = 1.0 / float(n_total)

    def kernel(sums_ref, ssqs_ref, gamma_ref, beta_ref, scale_ref, shift_ref):
        s = jnp.sum(sums_ref[...], axis=0, keepdims=True)
        s2 = jnp.sum(ssqs_ref[...], axis=0, keepdims=True)
        mean = s * inv_n
        # biased variance; clamp against catastrophic cancellation
        var = jnp.maximum(s2 * inv_n - mean * mean, 0.0)
        inv_std = lax.rsqrt(var + EPS)
        scale = gamma_ref[...].astype(jnp.float32) * inv_std
        scale_ref[...] = scale
        shift_ref[...] = beta_ref[...].astype(jnp.float32) - mean * scale

    return kernel


# ---------------------------------------------------------------------------
# Pass 2: fully parallel elementwise apply, y = x * scale + shift.
# ---------------------------------------------------------------------------
def _apply_kernel(x_ref, scale_ref, shift_ref, o_ref):
    y = x_ref[...].astype(jnp.float32) * scale_ref[...] + shift_ref[...]
    o_ref[...] = y.astype(o_ref.dtype)


# ---------------------------------------------------------------------------
# Fused single-pass fast path (small N): full row extent resident per feature
# tile; x read from HBM once, written once; exact centered variance.
# ---------------------------------------------------------------------------
def _fused_kernel(x_ref, gamma_ref, beta_ref, o_ref):
    x = x_ref[...].astype(jnp.float32)
    mean = jnp.mean(x, axis=0, keepdims=True)
    xc = x - mean
    var = jnp.mean(xc * xc, axis=0, keepdims=True)
    inv_std = lax.rsqrt(var + EPS)
    scale = gamma_ref[...].astype(jnp.float32) * inv_std
    o_ref[...] = (xc * scale + beta_ref[...].astype(jnp.float32)).astype(o_ref.dtype)


def _fused_tile_d(D):
    # >=2 lane-dense D tiles (when possible) so the fused path's HBM->VMEM load
    # pipelines against compute instead of running fully serially.
    for t in (512, 256, 128):
        if D % t == 0 and D // t >= 2:
            return t
    return D


def normalization_forward(x, gamma, beta, *, tile_n=None, tile_d=None,
                          force_two_pass=False):
    """Training-mode BatchNorm1d over the flattened (B*S, D) view of x."""
    B, S, D = x.shape
    N = B * S
    orig_dtype = x.dtype
    itemsize = jnp.dtype(x.dtype).itemsize
    limit = _vmem_limit_bytes()

    x2 = x.reshape(N, D)
    g2 = gamma.reshape(1, D).astype(jnp.float32)
    b2 = beta.reshape(1, D).astype(jnp.float32)

    # Lane-dense feature axis: pad D up to a multiple of 128 (padded gamma/beta
    # are zero, so padded columns normalize to 0 and are sliced away).
    Dp = ((D + 127) // 128) * 128
    if Dp != D:
        x2 = jnp.pad(x2, ((0, 0), (0, Dp - D)))
        g2 = jnp.pad(g2, ((0, 0), (0, Dp - D)))
        b2 = jnp.pad(b2, ((0, 0), (0, Dp - D)))

    # ---------------- fused single-pass fast path (small N) ----------------
    tile_df = _fused_tile_d(Dp) if tile_d is None else min(tile_d, Dp)
    fused_bytes = N * tile_df * (4 * itemsize + 12)   # 2 in + 2 out bufs + f32 temps
    fused_budget = min(limit // 2, 24 * 1024 * 1024)
    use_fused = (not force_two_pass) and fused_bytes <= fused_budget

    if use_fused:
        out2 = pl.pallas_call(
            _fused_kernel,
            out_shape=jax.ShapeDtypeStruct((N, Dp), orig_dtype),
            grid_spec=pltpu.PrefetchScalarGridSpec(
                num_scalar_prefetch=0,
                grid=(pl.cdiv(Dp, tile_df),),
                in_specs=[
                    pl.BlockSpec((N, tile_df), lambda j: (0, j)),
                    pl.BlockSpec((1, tile_df), lambda j: (0, j)),
                    pl.BlockSpec((1, tile_df), lambda j: (0, j)),
                ],
                out_specs=pl.BlockSpec((N, tile_df), lambda j: (0, j)),
            ),
            compiler_params=pltpu.CompilerParams(
                dimension_semantics=("parallel",),
                vmem_limit_bytes=limit,
            ),
            cost_estimate=pl.CostEstimate(
                flops=7 * N * Dp,
                transcendentals=Dp,
                bytes_accessed=2 * N * Dp * itemsize + 2 * Dp * 4,
            ),
        )(x2, g2, b2)
        if Dp != D:
            out2 = out2[:, :D]
        return out2.reshape(B, S, D)

    # ---------------------- two-pass streaming path -------------------------
    tile_d2 = min(Dp, 1024) if tile_d is None else min(tile_d, Dp)
    if tile_n is None:
        # Pass-1 block is (tile_n, Dp) double-buffered; pass-2 uses
        # 4 x (tile_n, tile_d2) buffers. Keep the larger within ~60% of budget.
        per_row = max(2 * Dp, 4 * tile_d2) * itemsize
        tile_n1 = int(0.6 * limit) // per_row
        tile_n1 = max(8, min(2048, (tile_n1 // 8) * 8))
    else:
        tile_n1 = max(1, tile_n)
    if tile_n1 >= N:
        tile_n1 = N                      # single full-N tile (any row count OK)
    elif tile_n1 % 8 != 0:
        tile_n1 = max(8, (tile_n1 // 8) * 8)

    n_tiles = pl.cdiv(N, tile_n1)
    n_split = 2 if n_tiles >= 2 else 1   # split pass-1 rows across v7x's 2 TCs
    tiles_per_split = pl.cdiv(n_tiles, n_split)
    exact = (n_split * tiles_per_split * tile_n1) == N
    last_block = n_tiles - 1

    def x_stats_map(c, i):
        # Clamp so the (rare) fully-out-of-range step of an odd split re-reads
        # the last valid tile; the kernel masks it to zero.
        return (jnp.minimum(c * tiles_per_split + i, last_block), 0)

    sums, ssqs = pl.pallas_call(
        _make_stats_kernel(N, tile_n1, tiles_per_split, exact),
        out_shape=(
            jax.ShapeDtypeStruct((n_split * 8, Dp), jnp.float32),
            jax.ShapeDtypeStruct((n_split * 8, Dp), jnp.float32),
        ),
        grid_spec=pltpu.PrefetchScalarGridSpec(
            num_scalar_prefetch=0,
            grid=(n_split, tiles_per_split),   # reduction axis last
            in_specs=[pl.BlockSpec((tile_n1, Dp), x_stats_map)],
            out_specs=[
                pl.BlockSpec((8, Dp), lambda c, i: (c, 0)),
                pl.BlockSpec((8, Dp), lambda c, i: (c, 0)),
            ],
        ),
        compiler_params=pltpu.CompilerParams(
            dimension_semantics=("parallel", "arbitrary"),
            vmem_limit_bytes=limit,
        ),
        cost_estimate=pl.CostEstimate(
            flops=3 * N * Dp,
            transcendentals=0,
            bytes_accessed=N * Dp * itemsize + 2 * n_split * 8 * Dp * 4,
        ),
    )(x2)

    scale, shift = pl.pallas_call(
        _make_fold_kernel(N),
        out_shape=(
            jax.ShapeDtypeStruct((1, Dp), jnp.float32),
            jax.ShapeDtypeStruct((1, Dp), jnp.float32),
        ),
        grid_spec=pltpu.PrefetchScalarGridSpec(
            num_scalar_prefetch=0,
            grid=(1,),
            in_specs=[
                pl.BlockSpec((n_split * 8, Dp), lambda i: (0, 0)),
                pl.BlockSpec((n_split * 8, Dp), lambda i: (0, 0)),
                pl.BlockSpec((1, Dp), lambda i: (0, 0)),
                pl.BlockSpec((1, Dp), lambda i: (0, 0)),
            ],
            out_specs=[
                pl.BlockSpec((1, Dp), lambda i: (0, 0)),
                pl.BlockSpec((1, Dp), lambda i: (0, 0)),
            ],
        ),
        compiler_params=pltpu.CompilerParams(
            dimension_semantics=("arbitrary",),
            vmem_limit_bytes=limit,
        ),
        cost_estimate=pl.CostEstimate(
            flops=8 * Dp * (n_split * 8 + 1),
            transcendentals=Dp,
            bytes_accessed=(2 * n_split * 8 + 4) * Dp * 4,
        ),
    )(sums, ssqs, g2, b2)

    out2 = pl.pallas_call(
        _apply_kernel,
        out_shape=jax.ShapeDtypeStruct((N, Dp), orig_dtype),
        grid_spec=pltpu.PrefetchScalarGridSpec(
            num_scalar_prefetch=0,
            grid=(pl.cdiv(N, tile_n1), pl.cdiv(Dp, tile_d2)),  # fully parallel
            in_specs=[
                pl.BlockSpec((tile_n1, tile_d2), lambda i, j: (i, j)),
                pl.BlockSpec((1, tile_d2), lambda i, j: (0, j)),
                pl.BlockSpec((1, tile_d2), lambda i, j: (0, j)),
            ],
            out_specs=pl.BlockSpec((tile_n1, tile_d2), lambda i, j: (i, j)),
        ),
        compiler_params=pltpu.CompilerParams(
            dimension_semantics=("parallel", "parallel"),
            vmem_limit_bytes=limit,
        ),
        cost_estimate=pl.CostEstimate(
            flops=2 * N * Dp,
            transcendentals=0,
            bytes_accessed=2 * N * Dp * itemsize + 2 * Dp * 4,
        ),
    )(x2, scale, shift)

    if Dp != D:
        out2 = out2[:, :D]
    return out2.reshape(B, S, D)


def _reference(x, gamma, beta):
    B, S, D = x.shape
    x2 = x.reshape(-1, D).astype(jnp.float32)
    mean = jnp.mean(x2, axis=0, keepdims=True)
    var = jnp.mean((x2 - mean) ** 2, axis=0, keepdims=True)
    y = (x2 - mean) / jnp.sqrt(var + EPS) * gamma[None, :] + beta[None, :]
    return y.reshape(B, S, D).astype(x.dtype)


if __name__ == "__main__":
    key = jax.random.PRNGKey(0)
    kx, kg, kb, kx2, kx3, kx4, kg2, kb2 = jax.random.split(key, 8)

    # Shapes consistent with the graph encoder usage: (batch, graph_size, embed_dim)
    B, S, D = 2, 8, 256
    x = jax.random.normal(kx, (B, S, D), dtype=jnp.float32)

    # Deterministic parameter init mirroring init_parameters(): U(-stdv, stdv)
    stdv = 1.0 / math.sqrt(D)
    gamma = jax.random.uniform(kg, (D,), minval=-stdv, maxval=stdv, dtype=jnp.float32)
    beta = jax.random.uniform(kb, (D,), minval=-stdv, maxval=stdv, dtype=jnp.float32)

    # 1) default path: small N -> fused single-pass kernel (pipelined over D tiles)
    out = jax.block_until_ready(normalization_forward(x, gamma, beta))
    ref = _reference(x, gamma, beta)
    assert out.shape == x.shape
    assert jnp.allclose(out, ref, atol=1e-4, rtol=1e-4), "fused path mismatch"

    # 2) two-pass path, ragged N (N=15), 2-way split with one tile per split
    B2, S2 = 3, 5
    x2 = jax.random.normal(kx2, (B2, S2, D), dtype=jnp.float32)
    out2 = jax.block_until_ready(
        normalization_forward(x2, gamma, beta, tile_n=8, tile_d=128,
                              force_two_pass=True))
    ref2 = _reference(x2, gamma, beta)
    assert out2.shape == x2.shape
    assert jnp.allclose(out2, ref2, atol=1e-4, rtol=1e-4), "two-pass ragged mismatch"

    # 3) two-pass path, odd tile count (N=24, 3 tiles -> one clamped/masked step)
    B3, S3 = 3, 8
    x3 = jax.random.normal(kx3, (B3, S3, D), dtype=jnp.float32)
    out3 = jax.block_until_ready(
        normalization_forward(x3, gamma, beta, tile_n=8, force_two_pass=True))
    ref3 = _reference(x3, gamma, beta)
    assert jnp.allclose(out3, ref3, atol=1e-4, rtol=1e-4), "two-pass split mismatch"

    # 4) non-128-multiple embed dim -> lane padding path (fused)
    D4 = 200
    stdv4 = 1.0 / math.sqrt(D4)
    gamma4 = jax.random.uniform(kg2, (D4,), minval=-stdv4, maxval=stdv4, dtype=jnp.float32)
    beta4 = jax.random.uniform(kb2, (D4,), minval=-stdv4, maxval=stdv4, dtype=jnp.float32)
    x4 = jax.random.normal(kx4, (2, 8, D4), dtype=jnp.float32)
    out4 = jax.block_until_ready(normalization_forward(x4, gamma4, beta4))
    ref4 = _reference(x4, gamma4, beta4)
    assert jnp.allclose(out4, ref4, atol=1e-4, rtol=1e-4), "padded-D path mismatch"

    print("KERNEL_OK")
</pallas_src>

<mosaic_0001>
module attributes {stable_mosaic.version = 11 : i64} {
  func.func @_fused_kernel(%arg0: i32, %arg1: memref<16x128xf32, #tpu.memory_space<vmem>>, %arg2: memref<1x128xf32, #tpu.memory_space<vmem>>, %arg3: memref<1x128xf32, #tpu.memory_space<vmem>>, %arg4: memref<16x128xf32, #tpu.memory_space<vmem>>) attributes {dimension_semantics = [#tpu.dimension_semantics<parallel>], iteration_bounds = array<i64: 2>, scalar_prefetch = 0 : i64, scratch_operands = 0 : i64, tpu.core_type = #tpu.core_type<tc>, window_params = [{transform_indices = @transform_0, window_bounds = array<i64: 16, 128>}, {transform_indices = @transform_1, window_bounds = array<i64: 1, 128>}, {transform_indices = @transform_2, window_bounds = array<i64: 1, 128>}, {transform_indices = @transform_3, window_bounds = array<i64: 16, 128>}]} {
    %c0 = arith.constant 0 : index
    %c0_0 = arith.constant 0 : index
    %0 = vector.load %arg1[%c0, %c0_0] : memref<16x128xf32, #tpu.memory_space<vmem>>, vector<16x128xf32>
    %cst = arith.constant dense<0.000000e+00> : vector<128xf32>
    %1 = vector.multi_reduction <add>, %0, %cst [0] : vector<16x128xf32> to vector<128xf32>
    %2 = vector.shape_cast %1 : vector<128xf32> to vector<1x128xf32>
    %cst_1 = arith.constant 1.600000e+01 : f32
    %3 = vector.broadcast %cst_1 : f32 to vector<1x128xf32>
    %4 = arith.divf %2, %3 : vector<1x128xf32>
    %5 = vector.broadcast %4 : vector<1x128xf32> to vector<16x128xf32>
    %6 = arith.subf %0, %5 : vector<16x128xf32>
    %7 = arith.mulf %6, %6 : vector<16x128xf32>
    %cst_2 = arith.constant dense<0.000000e+00> : vector<128xf32>
    %8 = vector.multi_reduction <add>, %7, %cst_2 [0] : vector<16x128xf32> to vector<128xf32>
    %9 = vector.shape_cast %8 : vector<128xf32> to vector<1x128xf32>
    %cst_3 = arith.constant 1.600000e+01 : f32
    %10 = vector.broadcast %cst_3 : f32 to vector<1x128xf32>
    %11 = arith.divf %9, %10 : vector<1x128xf32>
    %cst_4 = arith.constant 9.99999974E-6 : f32
    %12 = vector.broadcast %cst_4 : f32 to vector<1x128xf32>
    %13 = arith.addf %11, %12 : vector<1x128xf32>
    %14 = math.rsqrt %13 : vector<1x128xf32>
    %c0_5 = arith.constant 0 : index
    %c0_6 = arith.constant 0 : index
    %15 = vector.load %arg2[%c0_5, %c0_6] : memref<1x128xf32, #tpu.memory_space<vmem>>, vector<1x128xf32>
    %16 = arith.mulf %15, %14 : vector<1x128xf32>
    %17 = vector.broadcast %16 : vector<1x128xf32> to vector<16x128xf32>
    %18 = arith.mulf %6, %17 : vector<16x128xf32>
    %c0_7 = arith.constant 0 : index
    %c0_8 = arith.constant 0 : index
    %19 = vector.load %arg3[%c0_7, %c0_8] : memref<1x128xf32, #tpu.memory_space<vmem>>, vector<1x128xf32>
    %20 = vector.broadcast %19 : vector<1x128xf32> to vector<16x128xf32>
    %21 = arith.addf %18, %20 : vector<16x128xf32>
    %c0_9 = arith.constant 0 : index
    %c0_10 = arith.constant 0 : index
    %22 = vector.load %arg4[%c0_9, %c0_10] : memref<16x128xf32, #tpu.memory_space<vmem>>, vector<16x128xf32>
    tpu.vector_store %arg4[%c0_9, %c0_10], %21 {strides = array<i32>} : memref<16x128xf32, #tpu.memory_space<vmem>>, vector<16x128xf32>,
    return
  }
  func.func @transform_0(%arg0: i32) -> (i32, i32) {
    %c0_i32 = arith.constant 0 : i32
    %c0_i32_0 = arith.constant 0 : i32
    return %c0_i32, %arg0 : i32, i32
  }
  func.func @transform_1(%arg0: i32) -> (i32, i32) {
    %c0_i32 = arith.constant 0 : i32
    %c0_i32_0 = arith.constant 0 : i32
    return %c0_i32, %arg0 : i32, i32
  }
  func.func @transform_2(%arg0: i32) -> (i32, i32) {
    %c0_i32 = arith.constant 0 : i32
    %c0_i32_0 = arith.constant 0 : i32
    return %c0_i32, %arg0 : i32, i32
  }
  func.func @transform_3(%arg0: i32) -> (i32, i32) {
    %c0_i32 = arith.constant 0 : i32
    %c0_i32_0 = arith.constant 0 : i32
    return %c0_i32, %arg0 : i32, i32
  }
}

</mosaic_0001>

<llo_original>
// kernel: tpu_custom_call.1
$region0: #{tpu_custom_call.1}
  #allocation0 [shape = 'u32[]', space=smem, size = 0x4, offset = 0x4, fixed_abs, tag = 'smem constant byte address 0x4 - core index']
  #allocation1 [shape = 'u32[144,128]{1,0:T(1,128)}', space=vmem, size = 0x12000, scoped, tag = 'internal scratch']
  %s0 = inlined_call_operand.hbm [shape: f32[16,256], index: 0, kind: input, shape index: {}]
  %s1 = inlined_call_operand.vmem [shape: f32[1,256], index: 1, kind: input, shape index: {}]
  %s2 = inlined_call_operand.vmem [shape: f32[1,256], index: 2, kind: input, shape index: {}]
  %s3 = inlined_call_operand.hbm [shape: f32[16,256], index: 3, kind: output, shape index: {}]
  %s4 = sld [smem:[#allocation0]]
  $region49: #{tpu_custom_call.1} parent=0
    _
  %s6 = ssub.s32 1, %s4
  %s7 = scalar_select 0, %s6, %s4
  $region1: #{tpu_custom_call.1} parent=0
    #allocation2 [shape = 'u8[16384]{0}', space=vmem, size = 0x4000, scoped, tag = 'input window, operand 0']
    #allocation3 [shape = 's32[2]{0}', space=sflag, size = 0x8, scoped, tag = 'scoped memory for tpu_custom_call.1']
    #allocation4 [shape = 's32[2]{0}', space=sflag, size = 0x8, scoped, tag = 'scoped memory for tpu_custom_call.1']
    #allocation5 [shape = 'u8[16384]{0}', space=vmem, size = 0x4000, scoped, tag = 'output window, operand 0']
    %8 = vsyncpa [#allocation3], 0
    %s9 = scalar_lea.sflag [#allocation3], 1
    %10 = vsyncpa %s9, 0
    %11 = vsyncpa [#allocation4], 0
    %s12 = scalar_lea.sflag [#allocation4], 1
    %13 = vsyncpa %s12, 0
    loop: start=0, step=1, limit=4
    $region2: #{tpu_custom_call.1} parent=1 // loop_pre_header
      _
    $region3: #{tpu_custom_call.1} parent=1 // loop_header
      %s15 = sphi 0, %s19
      %p16 = scmp.ge.s32.totalorder %s15, 4
      %s25 = sphi 0, %s27
      %s28 = sphi 0, %s25
      %s29 = sphi 0, %s28
      %s45 = sphi 0, %s29
      %s51 = sphi 0, %s53
      %s54 = sphi 0, %s51
      %s55 = sphi 0, %s54
      %s71 = sphi 0, %s55
      %s77 = sphi 0, %s79
      %s80 = sphi 0, %s77
      %s81 = sphi 0, %s80
      %s97 = sphi 0, %s81
      %s103 = sphi 0, %s105
      %s106 = sphi 0, %s103
      %s107 = sphi 0, %s106
      %s123 = sphi 0, %s107
    $region4: #{tpu_custom_call.1} parent=1 // loop_header_branch
      %18 = sbr.rel (%p16) target = $region8
    $region5: #{tpu_custom_call.1} parent=1 // loop_body
      %s20 = ssub.s32 %s15, 1
      %s21 = ssub.s32 %s15, 2
      %s22 = sadd.s32 %s15, 1
      %s23 = ssub.s32 %s15, %s22
      %p24 = scmp.eq.s32.totalorder %s23, 0
      %s26 = sadd.s32 %s25, 1
      %s27 = scalar_select %p24, %s25, %s26
      %p30 = pneg %p24
      %p31 = scmp.eq.s32.totalorder %s15, 1
      %p32 = por %p30, %p31
      %p33 = scmp.ne.s32.totalorder %s25, %s28
      %p34 = scmp.eq.s32.totalorder %s15, 0
      %p35 = por %p33, %p34
      %p36 = scmp.ne.s32.totalorder %s25, %s28
      %p37 = scmp.eq.s32.totalorder %s20, 1
      %p38 = por %p36, %p37
      %p39 = scmp.ne.s32.totalorder %s28, %s29
      %p40 = scmp.eq.s32.totalorder %s20, 0
      %p41 = por %p39, %p40
      %p42 = scmp.ne.s32.totalorder %s28, %s29
      %p43 = scmp.eq.s32.totalorder %s21, 1
      %p44 = por %p42, %p43
      %p46 = scmp.ne.s32.totalorder %s29, %s45
      %p47 = scmp.eq.s32.totalorder %s21, 0
      %p48 = por %p46, %p47
      %s49 = ssub.s32 %s15, %s22
      %p50 = scmp.eq.s32.totalorder %s49, 0
      %s52 = sadd.s32 %s51, 1
      %s53 = scalar_select %p50, %s51, %s52
      %p56 = pneg %p50
      %p57 = scmp.eq.s32.totalorder %s15, 1
      %p58 = por %p56, %p57
      %p59 = scmp.ne.s32.totalorder %s51, %s54
      %p60 = scmp.eq.s32.totalorder %s15, 0
      %p61 = por %p59, %p60
      %p62 = scmp.ne.s32.totalorder %s51, %s54
      %p63 = scmp.eq.s32.totalorder %s20, 1
      %p64 = por %p62, %p63
      %p65 = scmp.ne.s32.totalorder %s54, %s55
      %p66 = scmp.eq.s32.totalorder %s20, 0
      %p67 = por %p65, %p66
      %p68 = scmp.ne.s32.totalorder %s54, %s55
      %p69 = scmp.eq.s32.totalorder %s21, 1
      %p70 = por %p68, %p69
      %p72 = scmp.ne.s32.totalorder %s55, %s71
      %p73 = scmp.eq.s32.totalorder %s21, 0
      %p74 = por %p72, %p73
      %s75 = ssub.s32 %s15, %s22
      %p76 = scmp.eq.s32.totalorder %s75, 0
      %s78 = sadd.s32 %s77, 1
      %s79 = scalar_select %p76, %s77, %s78
      %p82 = pneg %p76
      %p83 = scmp.eq.s32.totalorder %s15, 1
      %p84 = por %p82, %p83
      %p85 = scmp.ne.s32.totalorder %s77, %s80
      %p86 = scmp.eq.s32.totalorder %s15, 0
      %p87 = por %p85, %p86
      %p88 = scmp.ne.s32.totalorder %s77, %s80
      %p89 = scmp.eq.s32.totalorder %s20, 1
      %p90 = por %p88, %p89
      %p91 = scmp.ne.s32.totalorder %s80, %s81
      %p92 = scmp.eq.s32.totalorder %s20, 0
      %p93 = por %p91, %p92
      %p94 = scmp.ne.s32.totalorder %s80, %s81
      %p95 = scmp.eq.s32.totalorder %s21, 1
      %p96 = por %p94, %p95
      %p98 = scmp.ne.s32.totalorder %s81, %s97
      %p99 = scmp.eq.s32.totalorder %s21, 0
      %p100 = por %p98, %p99
      %s101 = ssub.s32 %s15, %s22
      %p102 = scmp.eq.s32.totalorder %s101, 0
      %s104 = sadd.s32 %s103, 1
      %s105 = scalar_select %p102, %s103, %s104
      %p108 = pneg %p102
      %p109 = scmp.eq.s32.totalorder %s15, 1
      %p110 = por %p108, %p109
      %p111 = scmp.ne.s32.totalorder %s103, %s106
      %p112 = scmp.eq.s32.totalorder %s15, 0
      %p113 = por %p111, %p112
      %p114 = scmp.ne.s32.totalorder %s103, %s106
      %p115 = scmp.eq.s32.totalorder %s20, 1
      %p116 = por %p114, %p115
      %p117 = scmp.ne.s32.totalorder %s106, %s107
      %p118 = scmp.eq.s32.totalorder %s20, 0
      %p119 = por %p117, %p118
      %p120 = scmp.ne.s32.totalorder %s106, %s107
      %p121 = scmp.eq.s32.totalorder %s21, 1
      %p122 = por %p120, %p121
      %p124 = scmp.ne.s32.totalorder %s107, %s123
      %p125 = scmp.eq.s32.totalorder %s21, 0
      %p126 = por %p124, %p125
      %p127 = scmp.le.s32.totalorder 1, %s15
      %p128 = scmp.lt.s32.totalorder %s15, 3
      %p129 = pnand %p127, %p128
      %p130 = pneg %p129
      // Predicated region
      $region9: #{tpu_custom_call.1} parent=5 // pred_check
        _
      $region10: #{tpu_custom_call.1} parent=5 // pred_check_branch
        %132 = sbr.rel (%p129) target = $region12
      $region11: #{tpu_custom_call.1} parent=5 // pred_region
        %s133 = ssub.s32 %s15, 1
      $region12: #{tpu_custom_call.1} parent=5 // pred_fallthru
        _
      %p134 = scmp.lt.s32.totalorder %s15, 2
      // Predicated region
      $region13: #{tpu_custom_call.1} parent=5 // pred_check
        %p135 = pneg %p134
      $region14: #{tpu_custom_call.1} parent=5 // pred_check_branch
        %137 = sbr.rel (%p135) target = $region16
      $region15: #{tpu_custom_call.1} parent=5 // pred_region
        // Predicated region
        $region17: #{tpu_custom_call.1} parent=15 // pred_check
          %p138 = pneg %p35
        $region18: #{tpu_custom_call.1} parent=15 // pred_check_branch
          %140 = sbr.rel (%p138) target = $region20
        $region19: #{tpu_custom_call.1} parent=15 // pred_region
          %s141 = sand.u32 %s25, 1
          %s142 = scalar_lea.sflag [#allocation3], %s141
          %s143 = sand.u32 %s25, 1
          %s144 = smul.addr %s143, 16
          %s145 = scalar_lea.vmem [#allocation2], %s144
          %s147 = ssub.s32 256, 256
          %148 = vsyncadd %s142, %s147
          %s149 = smul.addr %s15, 128
          %s150 = scalar_lea.hbm %s0, %s149
          %s151 = sshll.u32 %s145, 4
          %s152 = int_to_ptr.vmem [resolvable:$true] %s151
          %157 = dma.hbm_to_vmem [thread:$0]  %s150, 256, %s152, %s142, 256, 128, 8
        $region20: #{tpu_custom_call.1} parent=15 // pred_fallthru
          _
        // Predicated region
        $region21: #{tpu_custom_call.1} parent=15 // pred_check
          %p158 = pneg %p61
        $region22: #{tpu_custom_call.1} parent=15 // pred_check_branch
          %160 = sbr.rel (%p158) target = $region24
        $region23: #{tpu_custom_call.1} parent=15 // pred_region
          %p161 = scmp.lt.s32.totalorder %s15, 1
          %s162 = scalar_select %p161, %s15, 1
          %s163 = scalar_lea.vmem %s1, %s162
        $region24: #{tpu_custom_call.1} parent=15 // pred_fallthru
          _
        // Predicated region
        $region25: #{tpu_custom_call.1} parent=15 // pred_check
          %p164 = pneg %p87
        $region26: #{tpu_custom_call.1} parent=15 // pred_check_branch
          %166 = sbr.rel (%p164) target = $region28
        $region27: #{tpu_custom_call.1} parent=15 // pred_region
          %p167 = scmp.lt.s32.totalorder %s15, 1
          %s168 = scalar_select %p167, %s15, 1
          %s169 = scalar_lea.vmem %s2, %s168
        $region28: #{tpu_custom_call.1} parent=15 // pred_fallthru
          _
      $region16: #{tpu_custom_call.1} parent=5 // pred_fallthru
        _
      %p170 = scmp.le.s32.totalorder 1, %s15
      %p171 = scmp.lt.s32.totalorder %s15, 3
      %p172 = pnand %p170, %p171
      %p173 = pneg %p172
      // Predicated region
      $region29: #{tpu_custom_call.1} parent=5 // pred_check
        _
      $region30: #{tpu_custom_call.1} parent=5 // pred_check_branch
        %175 = sbr.rel (%p172) target = $region32
      $region31: #{tpu_custom_call.1} parent=5 // pred_region
        %s176 = ssub.s32 %s15, 1
        %s177 = sand.u32 %s28, 1
        %s178 = scalar_lea.sflag [#allocation3], %s177
        %s179 = sand.u32 %s28, 1
        %s180 = smul.addr %s179, 16
        %s181 = scalar_lea.vmem [#allocation2], %s180
        // Predicated region
        $region33: #{tpu_custom_call.1} parent=31 // pred_check
          %p182 = pneg %p41
        $region34: #{tpu_custom_call.1} parent=31 // pred_check_branch
          %184 = sbr.rel (%p182) target = $region36
        $region35: #{tpu_custom_call.1} parent=31 // pred_region
          %185 = dma.done %s178, 256
        $region36: #{tpu_custom_call.1} parent=31 // pred_fallthru
          _
        %s186 = sand.u32 %s28, 1
        %s187 = scalar_lea.sflag [#allocation3], %s186
        %s188 = sand.u32 %s28, 1
        %s189 = smul.addr %s188, 16
        %s190 = scalar_lea.vmem [#allocation2], %s189
        %p191 = pneg %p41
        %p192 = pneg %p38
        %p193 = scmp.lt.s32.totalorder %s20, 1
        %s194 = scalar_select %p193, %s20, 1
        %s195 = scalar_lea.vmem %s1, %s194
        %p196 = pneg %p67
        %p197 = pneg %p64
        %p198 = scmp.lt.s32.totalorder %s20, 1
        %s199 = scalar_select %p198, %s20, 1
        %s200 = scalar_lea.vmem %s2, %s199
        %p201 = pneg %p93
        %p202 = pneg %p90
        %p203 = pneg %p119
        %p204 = pneg %p116
        %s205 = sand.u32 %s106, 1
        %s206 = scalar_lea.sflag [#allocation4], %s205
        %s207 = sand.u32 %s106, 1
        %s208 = smul.addr %s207, 16
        %s209 = scalar_lea.vmem [#allocation5], %s208
        %p210 = scmp.lt.s32.totalorder %s20, 1
        %s211 = scalar_select %p210, %s20, 1
        %s212 = scalar_lea.vmem %s1, %s211
        %p213 = scmp.lt.s32.totalorder %s20, 1
        %s214 = scalar_select %p213, %s20, 1
        %s215 = scalar_lea.vmem %s2, %s214
        %v216 = vld [vmem:[%s181] sm:$0xff]
        %v217 = vld [vmem:[%s181 + $0x8] sm:$0xff]
        %v218 = vadd.f32 %v216, %v217
        %v219 = vrot.slane %v218, 4
        %v220 = vadd.f32 %v218, %v219
        %v221 = vrot.slane %v220, 2
        %v222 = vadd.f32 %v220, %v221
        %v223 = vrot.slane %v222, 1
        %v224 = vadd.f32 %v222, %v223
        %v225 = vrcp.pop 16.0
        %v226 = vmul.f32 %v224, %v225
        %v227 = vsub.f32 %v216, %v226
        %v228 = vsub.f32 %v217, %v226
        %v229 = vmul.f32 %v227, %v227
        %v230 = vmul.f32 %v228, %v228
        %v231 = vadd.f32 %v229, %v230
        %v232 = vrot.slane %v231, 4
        %v233 = vadd.f32 %v231, %v232
        %v234 = vrot.slane %v233, 2
        %v235 = vadd.f32 %v233, %v234
        %v236 = vrot.slane %v235, 1
        %v237 = vadd.f32 %v235, %v236
        %v238 = vmul.f32 %v237, %v225
        %v239 = vadd.f32 %v238, 1e-05
        %v240 = vrsqrt.pop %v239
        %v241 = vld [vmem:[%s212] sm:$0x1]
        %v242 = vmul.f32 %v241, %v240
        %v244 = vlaneseq
        %v245 = vshrl.u32 %v244, 7
        %v246 = vsub.s32 0, %v245
        %v247 = vrot.slane %v242, %v246
        %v249 = vmul.f32 %v227, %v247
        %v250 = vmul.f32 %v228, %v247
        %v251 = vld [vmem:[%s215] sm:$0x1]
        %v253 = vlaneseq
        %v254 = vshrl.u32 %v253, 7
        %v255 = vsub.s32 0, %v254
        %v256 = vrot.slane %v251, %v255
        %v258 = vadd.f32 %v249, %v256
        %v259 = vadd.f32 %v250, %v256
        %260 = vst [vmem:[%s209] sm:$0xff] %v258
        %261 = vst [vmem:[%s209 + $0x8] sm:$0xff] %v259
        %s262 = sand.u32 %s106, 1
        %s263 = scalar_lea.sflag [#allocation4], %s262
        %s264 = sand.u32 %s106, 1
        %s265 = smul.addr %s264, 16
        %s266 = scalar_lea.vmem [#allocation5], %s265
        // Predicated region
        $region37: #{tpu_custom_call.1} parent=31 // pred_check
          %p267 = pneg %p116
        $region38: #{tpu_custom_call.1} parent=31 // pred_check_branch
          %269 = sbr.rel (%p267) target = $region40
        $region39: #{tpu_custom_call.1} parent=31 // pred_region
          %s271 = ssub.s32 256, 256
          %272 = vsyncadd %s263, %s271
          %s273 = smul.addr %s20, 128
          %s274 = scalar_lea.hbm %s3, %s273
          %s275 = sshll.u32 %s266, 4
          %s276 = int_to_ptr.vmem [resolvable:$true] %s275
          %281 = dma.vmem_to_hbm [thread:$0]  %s276, 256, %s274, %s263, 128, 256, 8
        $region40: #{tpu_custom_call.1} parent=31 // pred_fallthru
          _
      $region32: #{tpu_custom_call.1} parent=5 // pred_fallthru
        _
      %p282 = scmp.le.s32.totalorder 2, %s15
      // Predicated region
      $region41: #{tpu_custom_call.1} parent=5 // pred_check
        %p283 = pneg %p282
      $region42: #{tpu_custom_call.1} parent=5 // pred_check_branch
        %285 = sbr.rel (%p283) target = $region44
      $region43: #{tpu_custom_call.1} parent=5 // pred_region
        %s286 = ssub.s32 %s15, 2
        // Predicated region
        $region45: #{tpu_custom_call.1} parent=43 // pred_check
          %p287 = pneg %p122
        $region46: #{tpu_custom_call.1} parent=43 // pred_check_branch
          %289 = sbr.rel (%p287) target = $region48
        $region47: #{tpu_custom_call.1} parent=43 // pred_region
          %s290 = sand.u32 %s107, 1
          %s291 = scalar_lea.sflag [#allocation4], %s290
          %s292 = sand.u32 %s107, 1
          %s293 = smul.addr %s292, 16
          %s294 = scalar_lea.vmem [#allocation5], %s293
          %295 = dma.done %s291, 256
        $region48: #{tpu_custom_call.1} parent=43 // pred_fallthru
          _
      $region44: #{tpu_custom_call.1} parent=5 // pred_fallthru
        _
    $region6: #{tpu_custom_call.1} parent=1 // loop_footer
      %s19 = sadd.s32 1, %s15
    $region7: #{tpu_custom_call.1} parent=1 // loop_footer_branch
      %14 = sbr.rel target = $region3
    $region8: #{tpu_custom_call.1} parent=1 // loop_exit
      _
    %296 = vsyncpa [#allocation3], 1
    %s297 = scalar_lea.sflag [#allocation3], 1
    %298 = vsyncpa %s297, 1
    %299 = vsyncpa [#allocation4], 1
    %s300 = scalar_lea.sflag [#allocation4], 1
    %301 = vsyncpa %s300, 1

</llo_original>
